<compile_context>
chip_gen: v5e
topology: v5e:2x2
jax: 0.10.0
libtpu: 0.0.40
codegen_flags: <defaults>
</compile_context>

<pallas_src>
import functools

import jax
import jax.numpy as jnp
from jax import lax
from jax.experimental import pallas as pl
from jax.experimental.pallas import tpu as pltpu


_VMEM_LIMIT = 32 * 1024 * 1024  # <= default scoped VMEM on v5e/v6e/v7x


def _conv_matmul_kernel(xcol_ref, w_ref, b_ref, y_ref, psum_ref, psumsq_ref, *, sub):
    # xcol_ref : (TM, K)   im2col patch rows (compute dtype, bf16 or f32)
    # w_ref    : (K, TC)   folded conv weights (compute dtype)
    # b_ref    : (1, TC)   conv bias (f32)
    # y_ref    : (TM, TC)  conv output tile (f32)
    # psum_ref / psumsq_ref : (SUB, TC) per-tile partial BN statistics (f32)
    y = jnp.dot(xcol_ref[...], w_ref[...], preferred_element_type=jnp.float32)
    y = y + b_ref[...]
    y_ref[...] = y
    tm, tc = y.shape
    yg = y.reshape(sub, tm // sub, tc)          # trivial leading-dim regroup
    psum_ref[...] = jnp.sum(yg, axis=1)         # partial sums (tree-reduced)
    psumsq_ref[...] = jnp.sum(yg * yg, axis=1)  # partial sums of squares


def _bn_relu_kernel(y_ref, psum_ref, psumsq_ref, g_ref, beta_ref, o_ref, *, count, eps):
    # y_ref    : (TM, TC)            conv output tile (f32)
    # psum_ref / psumsq_ref : (n_row*SUB, TC)  partial stats (tiny; reduced here)
    # g_ref / beta_ref : (1, TC)     BN affine parameters
    inv_count = 1.0 / count
    mean = jnp.sum(psum_ref[...], axis=0, keepdims=True) * inv_count
    ex2 = jnp.sum(psumsq_ref[...], axis=0, keepdims=True) * inv_count
    var = jnp.maximum(ex2 - mean * mean, 0.0)   # biased variance (training BN)
    scale = lax.rsqrt(var + eps) * g_ref[...]
    shift = beta_ref[...] - mean * scale
    o_ref[...] = jnp.maximum(y_ref[...] * scale + shift, 0.0).astype(o_ref.dtype)


def _pick_row_tile(m):
    for t in (256, 512, 128, 1024, 64, 32, 16, 8):
        if m % t == 0:
            return t
    return m  # fallback: single block (then n_row == 1)


def conv2d_bn_relu(x_nchw, weight_oihw, bias, gamma, beta, *, pad, stride,
                   groups=1, eps=1e-5, compute_dtype=jnp.float32):
    """Forward pass equivalent of the PyTorch `conv2d` module (training mode)."""
    assert groups == 1  # TODO(synk): grouped convolution not implemented
    n, cin, h, w = x_nchw.shape
    cout, cin_w, kh, kw = weight_oihw.shape
    assert cin_w == cin
    sh = sw = int(stride)
    ph = pw = int(pad)
    ho = (h + 2 * ph - kh) // sh + 1
    wo = (w + 2 * pw - kw) // sw + 1

    # ---- wrapper glue (plain JAX): layout + im2col ---------------------------
    # TODO(synk): accept/emit NHWC directly where the surrounding model allows
    # it, to drop these full-tensor transpose/pad passes.
    x = jnp.transpose(x_nchw, (0, 2, 3, 1)).astype(jnp.float32)       # NHWC
    x = jnp.pad(x, ((0, 0), (ph, ph), (pw, pw), (0, 0)))
    taps = []
    for ih in range(kh):                                              # static taps
        for iw in range(kw):
            taps.append(lax.slice(
                x, (0, ih, iw, 0),
                (n, ih + sh * (ho - 1) + 1, iw + sw * (wo - 1) + 1, cin),
                (1, sh, sw, 1)))                                      # (N,HO,WO,CIN)
    k = kh * kw * cin
    m = n * ho * wo
    x_col = jnp.concatenate(taps, axis=-1).reshape(m, k).astype(compute_dtype)

    # Weights OIHW -> (KH,KW,CIN,COUT) -> (K, COUT); pad COUT to a lane multiple.
    cout_p = max(128, ((cout + 127) // 128) * 128)
    w2 = jnp.transpose(weight_oihw, (2, 3, 1, 0)).reshape(k, cout).astype(jnp.float32)
    w2 = jnp.pad(w2, ((0, 0), (0, cout_p - cout))).astype(compute_dtype)
    b2 = jnp.pad(bias.astype(jnp.float32), (0, cout_p - cout)).reshape(1, cout_p)
    g2 = jnp.pad(gamma.astype(jnp.float32), (0, cout_p - cout)).reshape(1, cout_p)
    be2 = jnp.pad(beta.astype(jnp.float32), (0, cout_p - cout)).reshape(1, cout_p)

    # ---- tiling --------------------------------------------------------------
    tm = _pick_row_tile(m)
    n_row = m // tm
    tc = 256 if cout_p % 256 == 0 else 128     # 256-wide tiles when Cout allows
    n_cp = cout_p // tc
    sub = 8 if tm % 8 == 0 else 1              # sublane-aligned partial-stat rows

    cparams = pltpu.CompilerParams(
        dimension_semantics=("parallel", "parallel"),
        vmem_limit_bytes=_VMEM_LIMIT,
    )

    # ---- pass 1: conv matmul + bias + partial BN stats -----------------------
    conv_y, psum, psumsq = pl.pallas_call(
        functools.partial(_conv_matmul_kernel, sub=sub),
        out_shape=(
            jax.ShapeDtypeStruct((m, cout_p), jnp.float32),
            jax.ShapeDtypeStruct((n_row * sub, cout_p), jnp.float32),
            jax.ShapeDtypeStruct((n_row * sub, cout_p), jnp.float32),
        ),
        grid=(n_row, n_cp),
        in_specs=[
            pl.BlockSpec((tm, k), lambda i, j: (i, 0)),
            pl.BlockSpec((k, tc), lambda i, j: (0, j)),
            pl.BlockSpec((1, tc), lambda i, j: (0, j)),
        ],
        out_specs=(
            pl.BlockSpec((tm, tc), lambda i, j: (i, j)),
            pl.BlockSpec((sub, tc), lambda i, j: (i, j)),
            pl.BlockSpec((sub, tc), lambda i, j: (i, j)),
        ),
        compiler_params=cparams,
    )(x_col, w2, b2)

    # ---- pass 2: normalize with batch stats + ReLU ---------------------------
    out2 = pl.pallas_call(
        functools.partial(_bn_relu_kernel, count=float(m), eps=float(eps)),
        out_shape=jax.ShapeDtypeStruct((m, cout_p), jnp.float32),
        grid=(n_row, n_cp),
        in_specs=[
            pl.BlockSpec((tm, tc), lambda i, j: (i, j)),
            pl.BlockSpec((n_row * sub, tc), lambda i, j: (0, j)),
            pl.BlockSpec((n_row * sub, tc), lambda i, j: (0, j)),
            pl.BlockSpec((1, tc), lambda i, j: (0, j)),
            pl.BlockSpec((1, tc), lambda i, j: (0, j)),
        ],
        out_specs=pl.BlockSpec((tm, tc), lambda i, j: (i, j)),
        compiler_params=cparams,
    )(conv_y, psum, psumsq, g2, be2)

    # TODO(synk): BatchNorm2d running_mean/running_var updates are not emitted
    # (not needed for the training-mode forward output).
    out = out2[:, :cout].reshape(n, ho, wo, cout)
    return jnp.transpose(out, (0, 3, 1, 2))    # back to NCHW


def _reference(x, weight, bias, gamma, beta, *, pad, stride, eps=1e-5):
    conv = lax.conv_general_dilated(
        x, weight, (stride, stride), ((pad, pad), (pad, pad)),
        dimension_numbers=("NCHW", "OIHW", "NCHW"))
    conv = conv + bias.reshape(1, -1, 1, 1)
    mean = conv.mean(axis=(0, 2, 3), keepdims=True)
    var = ((conv - mean) ** 2).mean(axis=(0, 2, 3), keepdims=True)
    y = (conv - mean) * lax.rsqrt(var + eps) * gamma.reshape(1, -1, 1, 1) \
        + beta.reshape(1, -1, 1, 1)
    return jnp.maximum(y, 0.0)


if __name__ == "__main__":
    # Module config: conv2d(input_channels=4, output_channels=8,
    #                       kernel_size=3, pad=1, stride=1, groups=1)
    N, CIN, H, W = 2, 4, 16, 16
    COUT, K, PAD, STRIDE = 8, 3, 1, 1

    key = jax.random.PRNGKey(0)
    kx, kw_, kb = jax.random.split(key, 3)
    x = jax.random.normal(kx, (N, CIN, H, W), dtype=jnp.float32)

    # Deterministic parameter init (Kaiming-uniform-style bounds, like torch).
    fan_in = CIN * K * K
    bound = 1.0 / float(fan_in) ** 0.5
    weight = jax.random.uniform(kw_, (COUT, CIN, K, K), jnp.float32, -bound, bound)
    bias = jax.random.uniform(kb, (COUT,), jnp.float32, -bound, bound)
    gamma = jnp.ones((COUT,), jnp.float32)   # BatchNorm2d weight init
    beta = jnp.zeros((COUT,), jnp.float32)   # BatchNorm2d bias init

    ref = _reference(x, weight, bias, gamma, beta, pad=PAD, stride=STRIDE)

    # f32 MXU path: strict parity with the PyTorch module.
    out = conv2d_bn_relu(x, weight, bias, gamma, beta, pad=PAD, stride=STRIDE,
                         compute_dtype=jnp.float32)
    out = jax.block_until_ready(out)
    assert out.shape == (N, COUT, H, W), out.shape
    err_f32 = float(jnp.abs(out - ref).max())
    assert jnp.allclose(out, ref, atol=2e-4, rtol=2e-4), err_f32

    # bf16 MXU path (2x MXU throughput, f32 accumulation & f32 BN math).
    out_bf16 = conv2d_bn_relu(x, weight, bias, gamma, beta, pad=PAD, stride=STRIDE,
                              compute_dtype=jnp.bfloat16)
    out_bf16 = jax.block_until_ready(out_bf16)
    err_bf16 = float(jnp.abs(out_bf16 - ref).max())
    assert jnp.allclose(out_bf16, ref, atol=3e-2, rtol=3e-2), err_bf16

    print("KERNEL_OK")
</pallas_src>

<mosaic_0001>
module attributes {stable_mosaic.version = 11 : i64} {
  func.func @_conv_matmul_kernel(%arg0: i32, %arg1: i32, %arg2: memref<256x36xf32, #tpu.memory_space<vmem>>, %arg3: memref<36x128xf32, #tpu.memory_space<vmem>>, %arg4: memref<1x128xf32, #tpu.memory_space<vmem>>, %arg5: memref<256x128xf32, #tpu.memory_space<vmem>>, %arg6: memref<8x128xf32, #tpu.memory_space<vmem>>, %arg7: memref<8x128xf32, #tpu.memory_space<vmem>>) attributes {dimension_semantics = [#tpu.dimension_semantics<parallel>, #tpu.dimension_semantics<parallel>], iteration_bounds = array<i64: 2, 1>, scalar_prefetch = 0 : i64, scratch_operands = 0 : i64, tpu.core_type = #tpu.core_type<tc>, window_params = [{transform_indices = @transform_0, window_bounds = array<i64: 256, 36>}, {transform_indices = @transform_1, window_bounds = array<i64: 36, 128>}, {transform_indices = @transform_2, window_bounds = array<i64: 1, 128>}, {transform_indices = @transform_3, window_bounds = array<i64: 256, 128>}, {transform_indices = @transform_4, window_bounds = array<i64: 8, 128>}, {transform_indices = @transform_5, window_bounds = array<i64: 8, 128>}]} {
    %c0 = arith.constant 0 : index
    %c0_0 = arith.constant 0 : index
    %0 = vector.load %arg2[%c0, %c0_0] : memref<256x36xf32, #tpu.memory_space<vmem>>, vector<256x36xf32>
    %c0_1 = arith.constant 0 : index
    %c0_2 = arith.constant 0 : index
    %1 = vector.load %arg3[%c0_1, %c0_2] : memref<36x128xf32, #tpu.memory_space<vmem>>, vector<36x128xf32>
    %cst = arith.constant dense<0.000000e+00> : vector<256x128xf32>
    %2 = tpu.matmul %0, %1, %cst {dimension_numbers = #tpu.dot_dimension_numbers<[1], [0], [0], [1], [0, 0, 1, 1], [], []>} : vector<256x36xf32>, vector<36x128xf32>, vector<256x128xf32> -> vector<256x128xf32>
    %c0_3 = arith.constant 0 : index
    %c0_4 = arith.constant 0 : index
    %3 = vector.load %arg4[%c0_3, %c0_4] : memref<1x128xf32, #tpu.memory_space<vmem>>, vector<1x128xf32>
    %4 = vector.broadcast %3 : vector<1x128xf32> to vector<256x128xf32>
    %5 = arith.addf %2, %4 : vector<256x128xf32>
    %c0_5 = arith.constant 0 : index
    %c0_6 = arith.constant 0 : index
    %6 = vector.load %arg5[%c0_5, %c0_6] : memref<256x128xf32, #tpu.memory_space<vmem>>, vector<256x128xf32>
    tpu.vector_store %arg5[%c0_5, %c0_6], %5 {strides = array<i32>} : memref<256x128xf32, #tpu.memory_space<vmem>>, vector<256x128xf32>,
    %7 = vector.shape_cast %5 : vector<256x128xf32> to vector<8x32x128xf32>
    %cst_7 = arith.constant dense<0.000000e+00> : vector<8x128xf32>
    %8 = vector.multi_reduction <add>, %7, %cst_7 [1] : vector<8x32x128xf32> to vector<8x128xf32>
    %c0_8 = arith.constant 0 : index
    %c0_9 = arith.constant 0 : index
    %9 = vector.load %arg6[%c0_8, %c0_9] : memref<8x128xf32, #tpu.memory_space<vmem>>, vector<8x128xf32>
    tpu.vector_store %arg6[%c0_8, %c0_9], %8 {strides = array<i32>} : memref<8x128xf32, #tpu.memory_space<vmem>>, vector<8x128xf32>,
    %10 = arith.mulf %7, %7 : vector<8x32x128xf32>
    %cst_10 = arith.constant dense<0.000000e+00> : vector<8x128xf32>
    %11 = vector.multi_reduction <add>, %10, %cst_10 [1] : vector<8x32x128xf32> to vector<8x128xf32>
    %c0_11 = arith.constant 0 : index
    %c0_12 = arith.constant 0 : index
    %12 = vector.load %arg7[%c0_11, %c0_12] : memref<8x128xf32, #tpu.memory_space<vmem>>, vector<8x128xf32>
    tpu.vector_store %arg7[%c0_11, %c0_12], %11 {strides = array<i32>} : memref<8x128xf32, #tpu.memory_space<vmem>>, vector<8x128xf32>,
    return
  }
  func.func @transform_0(%arg0: i32, %arg1: i32) -> (i32, i32) {
    %c0_i32 = arith.constant 0 : i32
    %c0_i32_0 = arith.constant 0 : i32
    return %arg0, %c0_i32 : i32, i32
  }
  func.func @transform_1(%arg0: i32, %arg1: i32) -> (i32, i32) {
    %c0_i32 = arith.constant 0 : i32
    %c0_i32_0 = arith.constant 0 : i32
    return %c0_i32, %arg1 : i32, i32
  }
  func.func @transform_2(%arg0: i32, %arg1: i32) -> (i32, i32) {
    %c0_i32 = arith.constant 0 : i32
    %c0_i32_0 = arith.constant 0 : i32
    return %c0_i32, %arg1 : i32, i32
  }
  func.func @transform_3(%arg0: i32, %arg1: i32) -> (i32, i32) {
    %c0_i32 = arith.constant 0 : i32
    return %arg0, %arg1 : i32, i32
  }
  func.func @transform_4(%arg0: i32, %arg1: i32) -> (i32, i32) {
    %c0_i32 = arith.constant 0 : i32
    return %arg0, %arg1 : i32, i32
  }
  func.func @transform_5(%arg0: i32, %arg1: i32) -> (i32, i32) {
    %c0_i32 = arith.constant 0 : i32
    return %arg0, %arg1 : i32, i32
  }
}

</mosaic_0001>

<llo_original>
// kernel: tpu_custom_call.1
$region0: #{tpu_custom_call.1}
  #allocation0 [shape = 'u32[]', space=smem, size = 0x4, offset = 0x4, fixed_abs, tag = 'smem constant byte address 0x4 - core index']
  #allocation1 [shape = 'u32[72,128]{1,0:T(1,128)}', space=vmem, size = 0x9000, scoped, tag = 'internal scratch']
  %s0 = inlined_call_operand.vmem [shape: f32[512,36], index: 0, kind: input, shape index: {}]
  %s1 = inlined_call_operand.vmem [shape: f32[36,128], index: 1, kind: input, shape index: {}]
  %s2 = inlined_call_operand.vmem [shape: f32[1,128], index: 2, kind: input, shape index: {}]
  %s3 = inlined_call_operand.hbm [shape: f32[512,128], index: 3, kind: output, shape index: {0}]
  %s4 = inlined_call_operand.hbm [shape: f32[16,128], index: 4, kind: output, shape index: {1}]
  %s5 = inlined_call_operand.hbm [shape: f32[16,128], index: 5, kind: output, shape index: {2}]
  %6 = xla_tuple %s3, %s4, %s5
  %s7 = sld [smem:[#allocation0]]
  $region61: #{tpu_custom_call.1} parent=0
    _
  %s9 = ssub.s32 1, %s7
  %s10 = scalar_select 0, %s9, %s7
  $region1: #{tpu_custom_call.1} parent=0
    #allocation2 [shape = 'u8[262144]{0}', space=vmem, size = 0x40000, scoped, tag = 'output window, operand 0']
    #allocation3 [shape = 's32[2]{0}', space=sflag, size = 0x8, scoped, tag = 'scoped memory for tpu_custom_call.1']
    #allocation4 [shape = 'u8[8192]{0}', space=vmem, size = 0x2000, scoped, tag = 'output window, operand 1']
    #allocation5 [shape = 's32[2]{0}', space=sflag, size = 0x8, scoped, tag = 'scoped memory for tpu_custom_call.1']
    #allocation6 [shape = 'u8[8192]{0}', space=vmem, size = 0x2000, scoped, tag = 'output window, operand 2']
    %11 = vsyncpa [#allocation3], 0
    %s12 = scalar_lea.sflag [#allocation3], 1
    %13 = vsyncpa %s12, 0
    %14 = vsyncpa [#allocation5], 0
    %s15 = scalar_lea.sflag [#allocation5], 1
    %16 = vsyncpa %s15, 0
    loop: start=0, step=1, limit=4
    $region2: #{tpu_custom_call.1} parent=1 // loop_pre_header
      _
    $region3: #{tpu_custom_call.1} parent=1 // loop_header
      %s18 = sphi 0, %s22
      %p19 = scmp.ge.s32.totalorder %s18, 4
      %s25 = sphi 0, %s37
      %s26 = sphi 0, %s33
      %s27 = sphi 0, %s25
      %s28 = sphi 0, %s26
      %s29 = sphi 0, %s27
      %s30 = sphi 0, %s28
      %s40 = sphi 0, %s42
      %s43 = sphi 0, %s40
      %s44 = sphi 0, %s43
      %s60 = sphi 0, %s44
      %s66 = sphi 0, %s68
      %s69 = sphi 0, %s66
      %s70 = sphi 0, %s69
      %s86 = sphi 0, %s70
      %s92 = sphi 0, %s94
      %s95 = sphi 0, %s92
      %s96 = sphi 0, %s95
      %s112 = sphi 0, %s96
      %s120 = sphi 0, %s122
      %s123 = sphi 0, %s120
      %s124 = sphi 0, %s123
      %s140 = sphi 0, %s124
      %s148 = sphi 0, %s150
      %s151 = sphi 0, %s148
      %s152 = sphi 0, %s151
      %s168 = sphi 0, %s152
      %s176 = sphi 0, %s178
      %s179 = sphi 0, %s176
      %s180 = sphi 0, %s179
      %s196 = sphi 0, %s180
    $region4: #{tpu_custom_call.1} parent=1 // loop_header_branch
      %21 = sbr.rel (%p19) target = $region8
    $region5: #{tpu_custom_call.1} parent=1 // loop_body
      %s23 = ssub.s32 %s18, 1
      %s24 = ssub.s32 %s18, 2
      %s31 = sadd.s32 1, %s26
      %p32 = scmp.ge.s32.totalorder %s31, 1
      %s33 = scalar_select %p32, 0, %s31
      %s34 = sadd.s32 1, %s25
      %s35 = scalar_select %p32, %s34, %s25
      %p36 = scmp.ge.s32.totalorder %s35, 2
      %s37 = scalar_select %p36, 0, %s35
      %s38 = ssub.s32 %s25, %s37
      %p39 = scmp.eq.s32.totalorder %s38, 0
      %s41 = sadd.s32 %s40, 1
      %s42 = scalar_select %p39, %s40, %s41
      %p45 = pneg %p39
      %p46 = scmp.eq.s32.totalorder %s18, 1
      %p47 = por %p45, %p46
      %p48 = scmp.ne.s32.totalorder %s40, %s43
      %p49 = scmp.eq.s32.totalorder %s18, 0
      %p50 = por %p48, %p49
      %p51 = scmp.ne.s32.totalorder %s40, %s43
      %p52 = scmp.eq.s32.totalorder %s23, 1
      %p53 = por %p51, %p52
      %p54 = scmp.ne.s32.totalorder %s43, %s44
      %p55 = scmp.eq.s32.totalorder %s23, 0
      %p56 = por %p54, %p55
      %p57 = scmp.ne.s32.totalorder %s43, %s44
      %p58 = scmp.eq.s32.totalorder %s24, 1
      %p59 = por %p57, %p58
      %p61 = scmp.ne.s32.totalorder %s44, %s60
      %p62 = scmp.eq.s32.totalorder %s24, 0
      %p63 = por %p61, %p62
      %s64 = ssub.s32 %s26, %s33
      %p65 = scmp.eq.s32.totalorder %s64, 0
      %s67 = sadd.s32 %s66, 1
      %s68 = scalar_select %p65, %s66, %s67
      %p71 = pneg %p65
      %p72 = scmp.eq.s32.totalorder %s18, 1
      %p73 = por %p71, %p72
      %p74 = scmp.ne.s32.totalorder %s66, %s69
      %p75 = scmp.eq.s32.totalorder %s18, 0
      %p76 = por %p74, %p75
      %p77 = scmp.ne.s32.totalorder %s66, %s69
      %p78 = scmp.eq.s32.totalorder %s23, 1
      %p79 = por %p77, %p78
      %p80 = scmp.ne.s32.totalorder %s69, %s70
      %p81 = scmp.eq.s32.totalorder %s23, 0
      %p82 = por %p80, %p81
      %p83 = scmp.ne.s32.totalorder %s69, %s70
      %p84 = scmp.eq.s32.totalorder %s24, 1
      %p85 = por %p83, %p84
      %p87 = scmp.ne.s32.totalorder %s70, %s86
      %p88 = scmp.eq.s32.totalorder %s24, 0
      %p89 = por %p87, %p88
      %s90 = ssub.s32 %s26, %s33
      %p91 = scmp.eq.s32.totalorder %s90, 0
      %s93 = sadd.s32 %s92, 1
      %s94 = scalar_select %p91, %s92, %s93
      %p97 = pneg %p91
      %p98 = scmp.eq.s32.totalorder %s18, 1
      %p99 = por %p97, %p98
      %p100 = scmp.ne.s32.totalorder %s92, %s95
      %p101 = scmp.eq.s32.totalorder %s18, 0
      %p102 = por %p100, %p101
      %p103 = scmp.ne.s32.totalorder %s92, %s95
      %p104 = scmp.eq.s32.totalorder %s23, 1
      %p105 = por %p103, %p104
      %p106 = scmp.ne.s32.totalorder %s95, %s96
      %p107 = scmp.eq.s32.totalorder %s23, 0
      %p108 = por %p106, %p107
      %p109 = scmp.ne.s32.totalorder %s95, %s96
      %p110 = scmp.eq.s32.totalorder %s24, 1
      %p111 = por %p109, %p110
      %p113 = scmp.ne.s32.totalorder %s96, %s112
      %p114 = scmp.eq.s32.totalorder %s24, 0
      %p115 = por %p113, %p114
      %s116 = ssub.s32 %s25, %s37
      %s117 = ssub.s32 %s26, %s33
      %s118 = sor.u32 %s116, %s117
      %p119 = scmp.eq.s32.totalorder %s118, 0
      %s121 = sadd.s32 %s120, 1
      %s122 = scalar_select %p119, %s120, %s121
      %p125 = pneg %p119
      %p126 = scmp.eq.s32.totalorder %s18, 1
      %p127 = por %p125, %p126
      %p128 = scmp.ne.s32.totalorder %s120, %s123
      %p129 = scmp.eq.s32.totalorder %s18, 0
      %p130 = por %p128, %p129
      %p131 = scmp.ne.s32.totalorder %s120, %s123
      %p132 = scmp.eq.s32.totalorder %s23, 1
      %p133 = por %p131, %p132
      %p134 = scmp.ne.s32.totalorder %s123, %s124
      %p135 = scmp.eq.s32.totalorder %s23, 0
      %p136 = por %p134, %p135
      %p137 = scmp.ne.s32.totalorder %s123, %s124
      %p138 = scmp.eq.s32.totalorder %s24, 1
      %p139 = por %p137, %p138
      %p141 = scmp.ne.s32.totalorder %s124, %s140
      %p142 = scmp.eq.s32.totalorder %s24, 0
      %p143 = por %p141, %p142
      %s144 = ssub.s32 %s25, %s37
      %s145 = ssub.s32 %s26, %s33
      %s146 = sor.u32 %s144, %s145
      %p147 = scmp.eq.s32.totalorder %s146, 0
      %s149 = sadd.s32 %s148, 1
      %s150 = scalar_select %p147, %s148, %s149
      %p153 = pneg %p147
      %p154 = scmp.eq.s32.totalorder %s18, 1
      %p155 = por %p153, %p154
      %p156 = scmp.ne.s32.totalorder %s148, %s151
      %p157 = scmp.eq.s32.totalorder %s18, 0
      %p158 = por %p156, %p157
      %p159 = scmp.ne.s32.totalorder %s148, %s151
      %p160 = scmp.eq.s32.totalorder %s23, 1
      %p161 = por %p159, %p160
      %p162 = scmp.ne.s32.totalorder %s151, %s152
      %p163 = scmp.eq.s32.totalorder %s23, 0
      %p164 = por %p162, %p163
      %p165 = scmp.ne.s32.totalorder %s151, %s152
      %p166 = scmp.eq.s32.totalorder %s24, 1
      %p167 = por %p165, %p166
      %p169 = scmp.ne.s32.totalorder %s152, %s168
      %p170 = scmp.eq.s32.totalorder %s24, 0
      %p171 = por %p169, %p170
      %s172 = ssub.s32 %s25, %s37
      %s173 = ssub.s32 %s26, %s33
      %s174 = sor.u32 %s172, %s173
      %p175 = scmp.eq.s32.totalorder %s174, 0
      %s177 = sadd.s32 %s176, 1
      %s178 = scalar_select %p175, %s176, %s177
      %p181 = pneg %p175
      %p182 = scmp.eq.s32.totalorder %s18, 1
      %p183 = por %p181, %p182
      %p184 = scmp.ne.s32.totalorder %s176, %s179
      %p185 = scmp.eq.s32.totalorder %s18, 0
      %p186 = por %p184, %p185
      %p187 = scmp.ne.s32.totalorder %s176, %s179
      %p188 = scmp.eq.s32.totalorder %s23, 1
      %p189 = por %p187, %p188
      %p190 = scmp.ne.s32.totalorder %s179, %s180
      %p191 = scmp.eq.s32.totalorder %s23, 0
      %p192 = por %p190, %p191
      %p193 = scmp.ne.s32.totalorder %s179, %s180
      %p194 = scmp.eq.s32.totalorder %s24, 1
      %p195 = por %p193, %p194
      %p197 = scmp.ne.s32.totalorder %s180, %s196
      %p198 = scmp.eq.s32.totalorder %s24, 0
      %p199 = por %p197, %p198
      %p200 = scmp.le.s32.totalorder 1, %s18
      %p201 = scmp.lt.s32.totalorder %s18, 3
      %p202 = pnand %p200, %p201
      %p203 = pneg %p202
      // Predicated region
      $region9: #{tpu_custom_call.1} parent=5 // pred_check
        _
      $region10: #{tpu_custom_call.1} parent=5 // pred_check_branch
        %205 = sbr.rel (%p202) target = $region12
      $region11: #{tpu_custom_call.1} parent=5 // pred_region
        %s206 = ssub.s32 %s18, 1
        // Predicated region
        $region13: #{tpu_custom_call.1} parent=11 // pred_check
          %p207 = pneg %p82
        $region14: #{tpu_custom_call.1} parent=11 // pred_check_branch
          %209 = sbr.rel (%p207) target = $region16
        $region15: #{tpu_custom_call.1} parent=11 // pred_region
          %p210 = scmp.lt.s32.totalorder %s28, 0
          %s211 = scalar_select %p210, %s28, 0
          %s212 = smul.addr %s211, 8
          %s213 = scalar_lea.vmem %s1, %s212
        $region16: #{tpu_custom_call.1} parent=11 // pred_fallthru
          _
        // Predicated region
        $region17: #{tpu_custom_call.1} parent=11 // pred_check
          %p214 = pneg %p108
        $region18: #{tpu_custom_call.1} parent=11 // pred_check_branch
          %216 = sbr.rel (%p214) target = $region20
        $region19: #{tpu_custom_call.1} parent=11 // pred_region
          %p217 = scmp.lt.s32.totalorder %s28, 0
          %s218 = scalar_select %p217, %s28, 0
          %s219 = scalar_lea.vmem %s2, %s218
        $region20: #{tpu_custom_call.1} parent=11 // pred_fallthru
          _
      $region12: #{tpu_custom_call.1} parent=5 // pred_fallthru
        _
      %p220 = scmp.lt.s32.totalorder %s18, 2
      // Predicated region
      $region21: #{tpu_custom_call.1} parent=5 // pred_check
        %p221 = pneg %p220
      $region22: #{tpu_custom_call.1} parent=5 // pred_check_branch
        %223 = sbr.rel (%p221) target = $region24
      $region23: #{tpu_custom_call.1} parent=5 // pred_region
        // Predicated region
        $region25: #{tpu_custom_call.1} parent=23 // pred_check
          %p224 = pneg %p50
        $region26: #{tpu_custom_call.1} parent=23 // pred_check_branch
          %226 = sbr.rel (%p224) target = $region28
        $region27: #{tpu_custom_call.1} parent=23 // pred_region
          %s227 = smul.u32 32, %s25
          %p228 = scmp.lt.s32.totalorder %s227, 63
          %s229 = scalar_select %p228, %s227, 63
          %s230 = smul.addr %s229, 8
          %s231 = scalar_lea.vmem %s0, %s230
          %s232 = smul.u32 32, %s25
        $region28: #{tpu_custom_call.1} parent=23 // pred_fallthru
          _
      $region24: #{tpu_custom_call.1} parent=5 // pred_fallthru
        _
      %p233 = scmp.le.s32.totalorder 1, %s18
      %p234 = scmp.lt.s32.totalorder %s18, 3
      %p235 = pnand %p233, %p234
      %p236 = pneg %p235
      // Predicated region
      $region29: #{tpu_custom_call.1} parent=5 // pred_check
        _
      $region30: #{tpu_custom_call.1} parent=5 // pred_check_branch
        %238 = sbr.rel (%p235) target = $region32
      $region31: #{tpu_custom_call.1} parent=5 // pred_region
        %s239 = ssub.s32 %s18, 1
        %s240 = smul.u32 32, %s27
        %p241 = scmp.lt.s32.totalorder %s240, 63
        %s242 = scalar_select %p241, %s240, 63
        %s243 = smul.addr %s242, 8
        %s244 = scalar_lea.vmem %s0, %s243
        %p245 = pneg %p56
        %p246 = pneg %p53
        %p247 = scmp.lt.s32.totalorder %s28, 0
        %s248 = scalar_select %p247, %s28, 0
        %s249 = smul.addr %s248, 8
        %s250 = scalar_lea.vmem %s1, %s249
        %p251 = pneg %p82
        %p252 = pneg %p79
        %p253 = scmp.lt.s32.totalorder %s28, 0
        %s254 = scalar_select %p253, %s28, 0
        %s255 = scalar_lea.vmem %s2, %s254
        %p256 = pneg %p108
        %p257 = pneg %p105
        %p258 = pneg %p136
        %p259 = pneg %p133
        %s260 = sand.u32 %s123, 1
        %s261 = scalar_lea.sflag [#allocation3], %s260
        %s262 = sand.u32 %s123, 1
        %s263 = smul.addr %s262, 256
        %s264 = scalar_lea.vmem [#allocation2], %s263
        %p265 = pneg %p164
        %p266 = pneg %p161
        %s267 = sand.u32 %s23, 1
        %s268 = scalar_lea.sflag [#allocation5], %s267
        %s269 = sand.u32 %s151, 1
        %s270 = smul.addr %s269, 8
        %s271 = scalar_lea.vmem [#allocation4], %s270
        %p272 = pneg %p192
        %p273 = pneg %p189
        %s274 = sand.u32 %s23, 1
        %s275 = scalar_lea.sflag [#allocation5], %s274
        %s276 = sand.u32 %s179, 1
        %s277 = smul.addr %s276, 8
        %s278 = scalar_lea.vmem [#allocation6], %s277
        %s279 = smul.u32 32, %s27
        %p280 = scmp.lt.s32.totalorder %s279, 63
        %s281 = scalar_select %p280, %s279, 63
        %s282 = smul.addr %s281, 8
        %s283 = scalar_lea.vmem %s0, %s282
        %s284 = smul.u32 32, %s27
        %p285 = scmp.lt.s32.totalorder %s28, 0
        %s286 = scalar_select %p285, %s28, 0
        %s287 = smul.addr %s286, 8
        %s288 = scalar_lea.vmem %s1, %s287
        %p289 = scmp.lt.s32.totalorder %s28, 0
        %s290 = scalar_select %p289, %s28, 0
        %s291 = scalar_lea.vmem %s2, %s290
        %s292 = smul.u32 32, %s27
        %v293 = vld [vmem:[%s283] sm:$0xff]
        %v294 = vld [vmem:[%s283 + $0x8] sm:$0xff]
        %v295 = vld [vmem:[%s283 + $0x10] sm:$0xff]
        %v296 = vld [vmem:[%s283 + $0x18] sm:$0xff]
        %v297 = vld [vmem:[%s283 + $0x20] sm:$0xff]
        %v298 = vld [vmem:[%s283 + $0x28] sm:$0xff]
        %v299 = vld [vmem:[%s283 + $0x30] sm:$0xff]
        %v300 = vld [vmem:[%s283 + $0x38] sm:$0xff]
        %v301 = vld [vmem:[%s283 + $0x40] sm:$0xff]
        %v302 = vld [vmem:[%s283 + $0x48] sm:$0xff]
        %v303 = vld [vmem:[%s283 + $0x50] sm:$0xff]
        %v304 = vld [vmem:[%s283 + $0x58] sm:$0xff]
        %v305 = vld [vmem:[%s283 + $0x60] sm:$0xff]
        %v306 = vld [vmem:[%s283 + $0x68] sm:$0xff]
        %v307 = vld [vmem:[%s283 + $0x70] sm:$0xff]
        %v308 = vld [vmem:[%s283 + $0x78] sm:$0xff]
        %v309 = vld [vmem:[%s283 + $0x80] sm:$0xff]
        %v310 = vld [vmem:[%s283 + $0x88] sm:$0xff]
        %v311 = vld [vmem:[%s283 + $0x90] sm:$0xff]
        %v312 = vld [vmem:[%s283 + $0x98] sm:$0xff]
        %v313 = vld [vmem:[%s283 + $0xa0] sm:$0xff]
        %v314 = vld [vmem:[%s283 + $0xa8] sm:$0xff]
        %v315 = vld [vmem:[%s283 + $0xb0] sm:$0xff]
        %v316 = vld [vmem:[%s283 + $0xb8] sm:$0xff]
        %v317 = vld [vmem:[%s283 + $0xc0] sm:$0xff]
        %v318 = vld [vmem:[%s283 + $0xc8] sm:$0xff]
        %v319 = vld [vmem:[%s283 + $0xd0] sm:$0xff]
        %v320 = vld [vmem:[%s283 + $0xd8] sm:$0xff]
        %v321 = vld [vmem:[%s283 + $0xe0] sm:$0xff]
        %v322 = vld [vmem:[%s283 + $0xe8] sm:$0xff]
        %v323 = vld [vmem:[%s283 + $0xf0] sm:$0xff]
        %v324 = vld [vmem:[%s283 + $0xf8] sm:$0xff]
        %v325 = vld [vmem:[%s288] sm:$0xff]
        %v326 = vld [vmem:[%s288 + $0x8] sm:$0xff]
        %v327 = vld [vmem:[%s288 + $0x10] sm:$0xff]
        %v328 = vld [vmem:[%s288 + $0x18] sm:$0xff]
        %v329 = vld [vmem:[%s288 + $0x20] sm:$0xf]
        %v330 = vld [vmem:[%s291] sm:$0x1]
        %v332 = vperm.slane %v330, 0
        %vm334 = vcmask 293888
        %v336 = vsel %vm334, %v293, 0
        %v339 = vsel %vm334, %v294, 0
        %v342 = vsel %vm334, %v295, 0
        %v345 = vsel %vm334, %v296, 0
        %v348 = vsel %vm334, %v297, 0
        %v351 = vsel %vm334, %v298, 0
        %v354 = vsel %vm334, %v299, 0
        %v357 = vsel %vm334, %v300, 0
        %v360 = vsel %vm334, %v301, 0
        %v363 = vsel %vm334, %v302, 0
        %v366 = vsel %vm334, %v303, 0
        %v369 = vsel %vm334, %v304, 0
        %v372 = vsel %vm334, %v305, 0
        %v375 = vsel %vm334, %v306, 0
        %v378 = vsel %vm334, %v307, 0
        %v381 = vsel %vm334, %v308, 0
        %v384 = vsel %vm334, %v309, 0
        %v387 = vsel %vm334, %v310, 0
        %v390 = vsel %vm334, %v311, 0
        %v393 = vsel %vm334, %v312, 0
        %v396 = vsel %vm334, %v313, 0
        %v399 = vsel %vm334, %v314, 0
        %v402 = vsel %vm334, %v315, 0
        %v405 = vsel %vm334, %v316, 0
        %v408 = vsel %vm334, %v317, 0
        %v411 = vsel %vm334, %v318, 0
        %v414 = vsel %vm334, %v319, 0
        %v417 = vsel %vm334, %v320, 0
        %v420 = vsel %vm334, %v321, 0
        %v423 = vsel %vm334, %v322, 0
        %v426 = vsel %vm334, %v323, 0
        %v429 = vsel %vm334, %v324, 0
        %vm431 = vcmask 1043456
        %v433 = vsel %vm431, %v329, 0
        %435 = vmatpush.msra.mxu0 0.0
        %436 = vmatpush.msra.mxu0 0.0
        %437 = vmatpush.msra.mxu0 0.0
        %438 = vmatpush.msra.mxu0 0.0
        %439 = vmatpush.msra.mxu0 0.0
        %440 = vmatpush.msra.mxu0 0.0
        %441 = vmatpush.msra.mxu0 0.0
        %442 = vmatpush.msra.mxu0 0.0
        %443 = vmatpush.msra.mxu0 0.0
        %444 = vmatpush.msra.mxu0 0.0
        %445 = vmatpush.msra.mxu0 0.0
        %446 = vmatpush.msra.mxu0 %v433
        %447 = vmatpush.msra.mxu0 %v328
        %448 = vmatpush.msra.mxu0 %v327
        %449 = vmatpush.msra.mxu0 %v326
        %450 = vmatpush.msra.mxu0 %v325
        %451 = vmatmul.f32.gmra.mxu0 %v336
        %v452 = vpop.f32.mrf.mxu0
        %v453 = vadd.f32 %v332, %v452
        %454 = vmatmul.f32.gmra.mxu0 %v339
        %v455 = vpop.f32.mrf.mxu0
        %v456 = vadd.f32 %v332, %v455
        %457 = vmatmul.f32.gmra.mxu0 %v342
        %v458 = vpop.f32.mrf.mxu0
        %v459 = vadd.f32 %v332, %v458
        %460 = vmatmul.f32.gmra.mxu0 %v345
        %v461 = vpop.f32.mrf.mxu0
        %v462 = vadd.f32 %v332, %v461
        %463 = vmatmul.f32.gmra.mxu0 %v348
        %v464 = vpop.f32.mrf.mxu0
        %v465 = vadd.f32 %v332, %v464
        %466 = vmatmul.f32.gmra.mxu0 %v351
        %v467 = vpop.f32.mrf.mxu0
        %v468 = vadd.f32 %v332, %v467
        %469 = vmatmul.f32.gmra.mxu0 %v354
        %v470 = vpop.f32.mrf.mxu0
        %v471 = vadd.f32 %v332, %v470
        %472 = vmatmul.f32.gmra.mxu0 %v357
        %v473 = vpop.f32.mrf.mxu0
        %v474 = vadd.f32 %v332, %v473
        %475 = vmatmul.f32.gmra.mxu0 %v360
        %v476 = vpop.f32.mrf.mxu0
        %v477 = vadd.f32 %v332, %v476
        %478 = vmatmul.f32.gmra.mxu0 %v363
        %v479 = vpop.f32.mrf.mxu0
        %v480 = vadd.f32 %v332, %v479
        %481 = vmatmul.f32.gmra.mxu0 %v366
        %v482 = vpop.f32.mrf.mxu0
        %v483 = vadd.f32 %v332, %v482
        %484 = vmatmul.f32.gmra.mxu0 %v369
        %v485 = vpop.f32.mrf.mxu0
        %v486 = vadd.f32 %v332, %v485
        %487 = vmatmul.f32.gmra.mxu0 %v372
        %v488 = vpop.f32.mrf.mxu0
        %v489 = vadd.f32 %v332, %v488
        %490 = vmatmul.f32.gmra.mxu0 %v375
        %v491 = vpop.f32.mrf.mxu0
        %v492 = vadd.f32 %v332, %v491
        %493 = vmatmul.f32.gmra.mxu0 %v378
        %v494 = vpop.f32.mrf.mxu0
        %v495 = vadd.f32 %v332, %v494
        %496 = vmatmul.f32.gmra.mxu0 %v381
        %v497 = vpop.f32.mrf.mxu0
        %v498 = vadd.f32 %v332, %v497
        %499 = vmatmul.f32.gmra.mxu0 %v384
        %v500 = vpop.f32.mrf.mxu0
        %v501 = vadd.f32 %v332, %v500
        %502 = vmatmul.f32.gmra.mxu0 %v387
        %v503 = vpop.f32.mrf.mxu0
        %v504 = vadd.f32 %v332, %v503
        %505 = vmatmul.f32.gmra.mxu0 %v390
        %v506 = vpop.f32.mrf.mxu0
        %v507 = vadd.f32 %v332, %v506
        %508 = vmatmul.f32.gmra.mxu0 %v393
        %v509 = vpop.f32.mrf.mxu0
        %v510 = vadd.f32 %v332, %v509
        %511 = vmatmul.f32.gmra.mxu0 %v396
        %v512 = vpop.f32.mrf.mxu0
        %v513 = vadd.f32 %v332, %v512
        %514 = vmatmul.f32.gmra.mxu0 %v399
        %v515 = vpop.f32.mrf.mxu0
        %v516 = vadd.f32 %v332, %v515
        %517 = vmatmul.f32.gmra.mxu0 %v402
        %v518 = vpop.f32.mrf.mxu0
        %v519 = vadd.f32 %v332, %v518
        %520 = vmatmul.f32.gmra.mxu0 %v405
        %v521 = vpop.f32.mrf.mxu0
        %v522 = vadd.f32 %v332, %v521
        %523 = vmatmul.f32.gmra.mxu0 %v408
        %v524 = vpop.f32.mrf.mxu0
        %v525 = vadd.f32 %v332, %v524
        %526 = vmatmul.f32.gmra.mxu0 %v411
        %v527 = vpop.f32.mrf.mxu0
        %v528 = vadd.f32 %v332, %v527
        %529 = vmatmul.f32.gmra.mxu0 %v414
        %v530 = vpop.f32.mrf.mxu0
        %v531 = vadd.f32 %v332, %v530
        %532 = vmatmul.f32.gmra.mxu0 %v417
        %v533 = vpop.f32.mrf.mxu0
        %v534 = vadd.f32 %v332, %v533
        %535 = vmatmul.f32.gmra.mxu0 %v420
        %v536 = vpop.f32.mrf.mxu0
        %v537 = vadd.f32 %v332, %v536
        %538 = vmatmul.f32.gmra.mxu0 %v423
        %v539 = vpop.f32.mrf.mxu0
        %v540 = vadd.f32 %v332, %v539
        %541 = vmatmul.f32.gmra.mxu0 %v426
        %v542 = vpop.f32.mrf.mxu0
        %v543 = vadd.f32 %v332, %v542
        %544 = vmatmul.f32.gmra.mxu0 %v429
        %v545 = vpop.f32.mrf.mxu0
        %v546 = vadd.f32 %v332, %v545
        %547 = vdwg.mxu0
        %548 = vst [vmem:[%s264] sm:$0xff] %v453
        %549 = vst [vmem:[%s264 + $0x8] sm:$0xff] %v456
        %550 = vst [vmem:[%s264 + $0x10] sm:$0xff] %v459
        %551 = vst [vmem:[%s264 + $0x18] sm:$0xff] %v462
        %552 = vst [vmem:[%s264 + $0x20] sm:$0xff] %v465
        %553 = vst [vmem:[%s264 + $0x28] sm:$0xff] %v468
        %554 = vst [vmem:[%s264 + $0x30] sm:$0xff] %v471
        %555 = vst [vmem:[%s264 + $0x38] sm:$0xff] %v474
        %556 = vst [vmem:[%s264 + $0x40] sm:$0xff] %v477
        %557 = vst [vmem:[%s264 + $0x48] sm:$0xff] %v480
        %558 = vst [vmem:[%s264 + $0x50] sm:$0xff] %v483
        %559 = vst [vmem:[%s264 + $0x58] sm:$0xff] %v486
        %560 = vst [vmem:[%s264 + $0x60] sm:$0xff] %v489
        %561 = vst [vmem:[%s264 + $0x68] sm:$0xff] %v492
        %562 = vst [vmem:[%s264 + $0x70] sm:$0xff] %v495
        %563 = vst [vmem:[%s264 + $0x78] sm:$0xff] %v498
        %564 = vst [vmem:[%s264 + $0x80] sm:$0xff] %v501
        %565 = vst [vmem:[%s264 + $0x88] sm:$0xff] %v504
        %566 = vst [vmem:[%s264 + $0x90] sm:$0xff] %v507
        %567 = vst [vmem:[%s264 + $0x98] sm:$0xff] %v510
        %568 = vst [vmem:[%s264 + $0xa0] sm:$0xff] %v513
        %569 = vst [vmem:[%s264 + $0xa8] sm:$0xff] %v516
        %570 = vst [vmem:[%s264 + $0xb0] sm:$0xff] %v519
        %571 = vst [vmem:[%s264 + $0xb8] sm:$0xff] %v522
        %572 = vst [vmem:[%s264 + $0xc0] sm:$0xff] %v525
        %573 = vst [vmem:[%s264 + $0xc8] sm:$0xff] %v528
        %574 = vst [vmem:[%s264 + $0xd0] sm:$0xff] %v531
        %575 = vst [vmem:[%s264 + $0xd8] sm:$0xff] %v534
        %576 = vst [vmem:[%s264 + $0xe0] sm:$0xff] %v537
        %577 = vst [vmem:[%s264 + $0xe8] sm:$0xff] %v540
        %578 = vst [vmem:[%s264 + $0xf0] sm:$0xff] %v543
        %579 = vst [vmem:[%s264 + $0xf8] sm:$0xff] %v546
        %v580 = vadd.f32 %v453, %v456
        %v581 = vadd.f32 %v580, %v459
        %v582 = vadd.f32 %v581, %v462
        %v583 = vrot.slane %v582, 4
        %v584 = vadd.f32 %v582, %v583
        %v585 = vrot.slane %v584, 2
        %v586 = vadd.f32 %v584, %v585
        %v587 = vrot.slane %v586, 1
        %v588 = vadd.f32 %v586, %v587
        %v589 = vadd.f32 %v465, %v468
        %v590 = vadd.f32 %v589, %v471
        %v591 = vadd.f32 %v590, %v474
        %v592 = vrot.slane %v591, 4
        %v593 = vadd.f32 %v591, %v592
        %v594 = vrot.slane %v593, 2
        %v595 = vadd.f32 %v593, %v594
        %v596 = vrot.slane %v595, 1
        %v597 = vadd.f32 %v595, %v596
        %v598 = vadd.f32 %v477, %v480
        %v599 = vadd.f32 %v598, %v483
        %v600 = vadd.f32 %v599, %v486
        %v601 = vrot.slane %v600, 4
        %v602 = vadd.f32 %v600, %v601
        %v603 = vrot.slane %v602, 2
        %v604 = vadd.f32 %v602, %v603
        %v605 = vrot.slane %v604, 1
        %v606 = vadd.f32 %v604, %v605
        %v607 = vadd.f32 %v489, %v492
        %v608 = vadd.f32 %v607, %v495
        %v609 = vadd.f32 %v608, %v498
        %v610 = vrot.slane %v609, 4
        %v611 = vadd.f32 %v609, %v610
        %v612 = vrot.slane %v611, 2
        %v613 = vadd.f32 %v611, %v612
        %v614 = vrot.slane %v613, 1
        %v615 = vadd.f32 %v613, %v614
        %v616 = vadd.f32 %v501, %v504
        %v617 = vadd.f32 %v616, %v507
        %v618 = vadd.f32 %v617, %v510
        %v619 = vrot.slane %v618, 4
        %v620 = vadd.f32 %v618, %v619
        %v621 = vrot.slane %v620, 2
        %v622 = vadd.f32 %v620, %v621
        %v623 = vrot.slane %v622, 1
        %v624 = vadd.f32 %v622, %v623
        %v625 = vadd.f32 %v513, %v516
        %v626 = vadd.f32 %v625, %v519
        %v627 = vadd.f32 %v626, %v522
        %v628 = vrot.slane %v627, 4
        %v629 = vadd.f32 %v627, %v628
        %v630 = vrot.slane %v629, 2
        %v631 = vadd.f32 %v629, %v630
        %v632 = vrot.slane %v631, 1
        %v633 = vadd.f32 %v631, %v632
        %v634 = vadd.f32 %v525, %v528
        %v635 = vadd.f32 %v634, %v531
        %v636 = vadd.f32 %v635, %v534
        %v637 = vrot.slane %v636, 4
        %v638 = vadd.f32 %v636, %v637
        %v639 = vrot.slane %v638, 2
        %v640 = vadd.f32 %v638, %v639
        %v641 = vrot.slane %v640, 1
        %v642 = vadd.f32 %v640, %v641
        %v643 = vadd.f32 %v537, %v540
        %v644 = vadd.f32 %v643, %v543
        %v645 = vadd.f32 %v644, %v546
        %v646 = vrot.slane %v645, 4
        %v647 = vadd.f32 %v645, %v646
        %v648 = vrot.slane %v647, 2
        %v649 = vadd.f32 %v647, %v648
        %v650 = vrot.slane %v649, 1
        %v651 = vadd.f32 %v649, %v650
        %vm660 = vcmask 1041409
        %v661 = vsel %vm660, %v597, %v588
        %vm662 = vcmask 1042434
        %v663 = vsel %vm662, %v606, %v661
        %vm664 = vcmask 1043459
        %v665 = vsel %vm664, %v615, %v663
        %vm666 = vcmask 1044484
        %v667 = vsel %vm666, %v624, %v665
        %vm668 = vcmask 1045509
        %v669 = vsel %vm668, %v633, %v667
        %vm670 = vcmask 1046534
        %v671 = vsel %vm670, %v642, %v669
        %vm672 = vcmask 1047559
        %v673 = vsel %vm672, %v651, %v671
        %675 = vst [vmem:[%s271] sm:$0xff] %v673
        %v676 = vmul.f32 %v453, %v453
        %v677 = vmul.f32 %v456, %v456
        %v678 = vmul.f32 %v459, %v459
        %v679 = vmul.f32 %v462, %v462
        %v680 = vmul.f32 %v465, %v465
        %v681 = vmul.f32 %v468, %v468
        %v682 = vmul.f32 %v471, %v471
        %v683 = vmul.f32 %v474, %v474
        %v684 = vmul.f32 %v477, %v477
        %v685 = vmul.f32 %v480, %v480
        %v686 = vmul.f32 %v483, %v483
        %v687 = vmul.f32 %v486, %v486
        %v688 = vmul.f32 %v489, %v489
        %v689 = vmul.f32 %v492, %v492
        %v690 = vmul.f32 %v495, %v495
        %v691 = vmul.f32 %v498, %v498
        %v692 = vmul.f32 %v501, %v501
        %v693 = vmul.f32 %v504, %v504
        %v694 = vmul.f32 %v507, %v507
        %v695 = vmul.f32 %v510, %v510
        %v696 = vmul.f32 %v513, %v513
        %v697 = vmul.f32 %v516, %v516
        %v698 = vmul.f32 %v519, %v519
        %v699 = vmul.f32 %v522, %v522
        %v700 = vmul.f32 %v525, %v525
        %v701 = vmul.f32 %v528, %v528
        %v702 = vmul.f32 %v531, %v531
        %v703 = vmul.f32 %v534, %v534
        %v704 = vmul.f32 %v537, %v537
        %v705 = vmul.f32 %v540, %v540
        %v706 = vmul.f32 %v543, %v543
        %v707 = vmul.f32 %v546, %v546
        %v708 = vadd.f32 %v676, %v677
        %v709 = vadd.f32 %v708, %v678
        %v710 = vadd.f32 %v709, %v679
        %v711 = vrot.slane %v710, 4
        %v712 = vadd.f32 %v710, %v711
        %v713 = vrot.slane %v712, 2
        %v714 = vadd.f32 %v712, %v713
        %v715 = vrot.slane %v714, 1
        %v716 = vadd.f32 %v714, %v715
        %v717 = vadd.f32 %v680, %v681
        %v718 = vadd.f32 %v717, %v682
        %v719 = vadd.f32 %v718, %v683
        %v720 = vrot.slane %v719, 4
        %v721 = vadd.f32 %v719, %v720
        %v722 = vrot.slane %v721, 2
        %v723 = vadd.f32 %v721, %v722
        %v724 = vrot.slane %v723, 1
        %v725 = vadd.f32 %v723, %v724
        %v726 = vadd.f32 %v684, %v685
        %v727 = vadd.f32 %v726, %v686
        %v728 = vadd.f32 %v727, %v687
        %v729 = vrot.slane %v728, 4
        %v730 = vadd.f32 %v728, %v729
        %v731 = vrot.slane %v730, 2
        %v732 = vadd.f32 %v730, %v731
        %v733 = vrot.slane %v732, 1
        %v734 = vadd.f32 %v732, %v733
        %v735 = vadd.f32 %v688, %v689
        %v736 = vadd.f32 %v735, %v690
        %v737 = vadd.f32 %v736, %v691
        %v738 = vrot.slane %v737, 4
        %v739 = vadd.f32 %v737, %v738
        %v740 = vrot.slane %v739, 2
        %v741 = vadd.f32 %v739, %v740
        %v742 = vrot.slane %v741, 1
        %v743 = vadd.f32 %v741, %v742
        %v744 = vadd.f32 %v692, %v693
        %v745 = vadd.f32 %v744, %v694
        %v746 = vadd.f32 %v745, %v695
        %v747 = vrot.slane %v746, 4
        %v748 = vadd.f32 %v746, %v747
        %v749 = vrot.slane %v748, 2
        %v750 = vadd.f32 %v748, %v749
        %v751 = vrot.slane %v750, 1
        %v752 = vadd.f32 %v750, %v751
        %v753 = vadd.f32 %v696, %v697
        %v754 = vadd.f32 %v753, %v698
        %v755 = vadd.f32 %v754, %v699
        %v756 = vrot.slane %v755, 4
        %v757 = vadd.f32 %v755, %v756
        %v758 = vrot.slane %v757, 2
        %v759 = vadd.f32 %v757, %v758
        %v760 = vrot.slane %v759, 1
        %v761 = vadd.f32 %v759, %v760
        %v762 = vadd.f32 %v700, %v701
        %v763 = vadd.f32 %v762, %v702
        %v764 = vadd.f32 %v763, %v703
        %v765 = vrot.slane %v764, 4
        %v766 = vadd.f32 %v764, %v765
        %v767 = vrot.slane %v766, 2
        %v768 = vadd.f32 %v766, %v767
        %v769 = vrot.slane %v768, 1
        %v770 = vadd.f32 %v768, %v769
        %v771 = vadd.f32 %v704, %v705
        %v772 = vadd.f32 %v771, %v706
        %v773 = vadd.f32 %v772, %v707
        %v774 = vrot.slane %v773, 4
        %v775 = vadd.f32 %v773, %v774
        %v776 = vrot.slane %v775, 2
        %v777 = vadd.f32 %v775, %v776
        %v778 = vrot.slane %v777, 1
        %v779 = vadd.f32 %v777, %v778
        %v788 = vsel %vm660, %v725, %v716
        %v789 = vsel %vm662, %v734, %v788
        %v790 = vsel %vm664, %v743, %v789
        %v791 = vsel %vm666, %v752, %v790
        %v792 = vsel %vm668, %v761, %v791
        %v793 = vsel %vm670, %v770, %v792
        %v794 = vsel %vm672, %v779, %v793
        %796 = vst [vmem:[%s278] sm:$0xff] %v794
        %s797 = sand.u32 %s123, 1
        %s798 = scalar_lea.sflag [#allocation3], %s797
        %s799 = sand.u32 %s123, 1
        %s800 = smul.addr %s799, 256
        %s801 = scalar_lea.vmem [#allocation2], %s800
        %s802 = sand.u32 %s23, 1
        %s803 = scalar_lea.sflag [#allocation5], %s802
        %s804 = sand.u32 %s151, 1
        %s805 = smul.addr %s804, 8
        %s806 = scalar_lea.vmem [#allocation4], %s805
        %s807 = sand.u32 %s23, 1
        %s808 = scalar_lea.sflag [#allocation5], %s807
        %s809 = sand.u32 %s179, 1
        %s810 = smul.addr %s809, 8
        %s811 = scalar_lea.vmem [#allocation6], %s810
        // Predicated region
        $region33: #{tpu_custom_call.1} parent=31 // pred_check
          %p812 = pneg %p133
        $region34: #{tpu_custom_call.1} parent=31 // pred_check_branch
          %814 = sbr.rel (%p812) target = $region36
        $region35: #{tpu_custom_call.1} parent=31 // pred_region
          %s815 = smul.u32 32, %s27
          %817 = vsyncadd %s798, 0
          %s818 = sadd.s32 %s28, %s815
          %s819 = smul.addr %s818, 8
          %s820 = scalar_lea.hbm %s3, %s819
          %s821 = sshll.u32 %s801, 4
          %s822 = int_to_ptr.vmem [resolvable:$true] %s821
          %s823 = sshll.u32 %s820, 4
          %s824 = int_to_ptr.hbm [resolvable:$true] %s823
          %829 = dma.vmem_to_hbm [thread:$0]  %s822, 4096, %s824, %s798, 128, 128, 8
        $region36: #{tpu_custom_call.1} parent=31 // pred_fallthru
          _
        // Predicated region
        $region37: #{tpu_custom_call.1} parent=31 // pred_check
          %p830 = pneg %p161
        $region38: #{tpu_custom_call.1} parent=31 // pred_check_branch
          %832 = sbr.rel (%p830) target = $region40
        $region39: #{tpu_custom_call.1} parent=31 // pred_region
          %834 = vsyncadd %s803, 0
          %s835 = sadd.s32 %s28, %s27
          %s836 = smul.addr %s835, 8
          %s837 = scalar_lea.hbm %s4, %s836
          %s839 = sshll.u32 %s806, 4
          %s840 = int_to_ptr.vmem [resolvable:$true] %s839
          %s841 = sshll.u32 %s837, 4
          %s842 = int_to_ptr.hbm [resolvable:$true] %s841
          %844 = dma.vmem_to_hbm [thread:$0]  %s840, 128, %s842, %s803
        $region40: #{tpu_custom_call.1} parent=31 // pred_fallthru
          _
        // Predicated region
        $region41: #{tpu_custom_call.1} parent=31 // pred_check
          %p845 = pneg %p189
        $region42: #{tpu_custom_call.1} parent=31 // pred_check_branch
          %847 = sbr.rel (%p845) target = $region44
        $region43: #{tpu_custom_call.1} parent=31 // pred_region
          %849 = vsyncadd %s808, 0
          %s850 = sadd.s32 %s28, %s27
          %s851 = smul.addr %s850, 8
          %s852 = scalar_lea.hbm %s5, %s851
          %s854 = sshll.u32 %s811, 4
          %s855 = int_to_ptr.vmem [resolvable:$true] %s854
          %s856 = sshll.u32 %s852, 4
          %s857 = int_to_ptr.hbm [resolvable:$true] %s856
          %859 = dma.vmem_to_hbm [thread:$0]  %s855, 128, %s857, %s808
        $region44: #{tpu_custom_call.1} parent=31 // pred_fallthru
          _
      $region32: #{tpu_custom_call.1} parent=5 // pred_fallthru
        _
      %p860 = scmp.le.s32.totalorder 2, %s18
      // Predicated region
      $region45: #{tpu_custom_call.1} parent=5 // pred_check
        %p861 = pneg %p860
      $region46: #{tpu_custom_call.1} parent=5 // pred_check_branch
        %863 = sbr.rel (%p861) target = $region48
      $region47: #{tpu_custom_call.1} parent=5 // pred_region
        %s864 = ssub.s32 %s18, 2
        // Predicated region
        $region49: #{tpu_custom_call.1} parent=47 // pred_check
          %p865 = pneg %p139
        $region50: #{tpu_custom_call.1} parent=47 // pred_check_branch
          %867 = sbr.rel (%p865) target = $region52
        $region51: #{tpu_custom_call.1} parent=47 // pred_region
          %s868 = sand.u32 %s124, 1
          %s869 = scalar_lea.sflag [#allocation3], %s868
          %s870 = sand.u32 %s124, 1
          %s871 = smul.addr %s870, 256
          %s872 = scalar_lea.vmem [#allocation2], %s871
          %874 = dma.done %s869, 4096
        $region52: #{tpu_custom_call.1} parent=47 // pred_fallthru
          _
        // Predicated region
        $region53: #{tpu_custom_call.1} parent=47 // pred_check
          %p875 = pneg %p167
        $region54: #{tpu_custom_call.1} parent=47 // pred_check_branch
          %877 = sbr.rel (%p875) target = $region56
        $region55: #{tpu_custom_call.1} parent=47 // pred_region
          %s878 = sand.u32 %s24, 1
          %s879 = scalar_lea.sflag [#allocation5], %s878
          %s880 = sand.u32 %s152, 1
          %s881 = smul.addr %s880, 8
          %s882 = scalar_lea.vmem [#allocation4], %s881
          %884 = dma.done %s879, 128
        $region56: #{tpu_custom_call.1} parent=47 // pred_fallthru
          _
        // Predicated region
        $region57: #{tpu_custom_call.1} parent=47 // pred_check
          %p885 = pneg %p195
        $region58: #{tpu_custom_call.1} parent=47 // pred_check_branch
          %887 = sbr.rel (%p885) target = $region60
        $region59: #{tpu_custom_call.1} parent=47 // pred_region
          %s888 = sand.u32 %s24, 1
          %s889 = scalar_lea.sflag [#allocation5], %s888
          %s890 = sand.u32 %s180, 1
          %s891 = smul.addr %s890, 8
          %s892 = scalar_lea.vmem [#allocation6], %s891
          %894 = dma.done %s889, 128
        $region60: #{tpu_custom_call.1} parent=47 // pred_fallthru
          _
      $region48: #{tpu_custom_call.1} parent=5 // pred_fallthru
        _
    $region6: #{tpu_custom_call.1} parent=1 // loop_footer
      %s22 = sadd.s32 1, %s18
    $region7: #{tpu_custom_call.1} parent=1 // loop_footer_branch
      %17 = sbr.rel target = $region3
    $region8: #{tpu_custom_call.1} parent=1 // loop_exit
      _
    %895 = vsyncpa [#allocation3], 1
    %s896 = scalar_lea.sflag [#allocation3], 1
    %897 = vsyncpa %s896, 1
    %898 = vsyncpa [#allocation5], 1
    %s899 = scalar_lea.sflag [#allocation5], 1
    %900 = vsyncpa %s899, 1

</llo_original>
